<compile_context>
chip_gen: v5e
topology: v5e:2x2
jax: 0.10.0
libtpu: 0.0.40
codegen_flags: <defaults>
</compile_context>

<pallas_src>
import functools

import jax
import jax.numpy as jnp
from jax.experimental import pallas as pl
from jax.experimental.pallas import tpu as pltpu


def _round_up(x, m):
    return ((x + m - 1) // m) * m


def _fc_sigmoid_kernel(x_ref, wt_ref, b_ref, o_ref, acc_ref):
    """Produces one (tm, tn) output tile; K is the last (reduction) grid axis."""
    k = pl.program_id(2)

    @pl.when(k == 0)
    def _():
        acc_ref[...] = jnp.zeros_like(acc_ref)

    # bf16 x bf16 -> f32 accumulate on the MXU.
    acc_ref[...] += jnp.dot(
        x_ref[...], wt_ref[...], preferred_element_type=jnp.float32
    )

    @pl.when(k == pl.num_programs(2) - 1)
    def _():
        z = acc_ref[...] + b_ref[...]            # f32 epilogue, (tm,tn) + (1,tn)
        e = jnp.exp(-z)                          # EUP
        o_ref[...] = pl.reciprocal(1.0 + e, approx=True).astype(o_ref.dtype)


@functools.partial(jax.jit, static_argnames=("tm", "tn", "tk"))
def fully_connected_block(x, wt, b, *, tm=256, tn=256, tk=512):
    """y = sigmoid(x @ wt + b).

    x : (B, K) float32
    wt: (K, N) float32  (linear weight already transposed)
    b : (1, N) float32
    """
    B, K = x.shape
    K2, N = wt.shape
    assert K == K2 and b.shape == (1, N)
    out_dtype = x.dtype

    # Pad to (8, 128)-friendly, tile-divisible shapes.  Zero padding along K
    # contributes nothing to the matmul; padded N columns are sliced off.
    Mp = _round_up(B, 8)
    Kp = _round_up(K, 128)
    Np = _round_up(N, 128)
    tm = min(tm, Mp)
    tk = min(tk, Kp)
    tn = min(tn, Np)
    Mp = _round_up(Mp, tm)
    Kp = _round_up(Kp, tk)
    Np = _round_up(Np, tn)

    # bf16 matmul inputs; f32 bias / accumulator / activation.
    xp = jnp.pad(x, ((0, Mp - B), (0, Kp - K))).astype(jnp.bfloat16)
    wtp = jnp.pad(wt, ((0, Kp - K), (0, Np - N))).astype(jnp.bfloat16)
    bp = jnp.pad(b, ((0, 0), (0, Np - N))).astype(jnp.float32)

    grid = (Mp // tm, Np // tn, Kp // tk)

    out = pl.pallas_call(
        _fc_sigmoid_kernel,
        out_shape=jax.ShapeDtypeStruct((Mp, Np), out_dtype),
        grid_spec=pltpu.PrefetchScalarGridSpec(
            num_scalar_prefetch=0,
            grid=grid,
            in_specs=[
                pl.BlockSpec((tm, tk), lambda i, j, k: (i, k)),   # x tile
                pl.BlockSpec((tk, tn), lambda i, j, k: (k, j)),   # W^T tile
                pl.BlockSpec((1, tn), lambda i, j, k: (0, j)),    # bias tile
            ],
            out_specs=pl.BlockSpec((tm, tn), lambda i, j, k: (i, j)),
            scratch_shapes=[pltpu.VMEM((tm, tn), jnp.float32)],
        ),
        compiler_params=pltpu.CompilerParams(
            dimension_semantics=("parallel", "parallel", "arbitrary"),
            vmem_limit_bytes=32 * 1024 * 1024,
        ),
    )(xp, wtp, bp)

    return out[:B, :N]


def init_params(key, in_features, out_features, use_batchnorm=False):
    """Matches the PyTorch init: W ~ N(0, 0.2), bias ~ N(0.5, 0.01) (if present)."""
    kw, kb = jax.random.split(key)
    w = 0.2 * jax.random.normal(kw, (out_features, in_features), jnp.float32)
    if use_batchnorm:
        b = jnp.zeros((out_features,), jnp.float32)
    else:
        b = 0.5 + 0.01 * jax.random.normal(kb, (out_features,), jnp.float32)
    return w, b


def fold_batchnorm(w, b, gamma, beta, running_mean, running_var, eps=1e-5):
    """Eval-mode BatchNorm1d folded into the linear weights (plain-JAX glue)."""
    scale = gamma / jnp.sqrt(running_var + eps)          # (N,)
    w_f = w * scale[:, None]                             # (N, K)
    b_f = (b - running_mean) * scale + beta              # (N,)
    return w_f, b_f


if __name__ == "__main__":
    key = jax.random.PRNGKey(0)
    kx, kp = jax.random.split(key)

    batch, in_features, out_features = 8, 32, 64
    x = jax.random.normal(kx, (batch, in_features), jnp.float32)

    # Default module config: bias linear, no batchnorm, no dropout.
    w, b = init_params(kp, in_features, out_features, use_batchnorm=False)

    wt = jnp.transpose(w)                # (K, N)
    b2 = b.reshape(1, out_features)      # (1, N)

    out = fully_connected_block(x, wt, b2)
    out = jax.block_until_ready(out)

    # Sanity check against plain-JAX f32 reference (tolerance loosened for the
    # bf16 matmul inputs + approx reciprocal).
    ref = jax.nn.sigmoid(x @ wt + b2)
    assert out.shape == (batch, out_features)
    assert jnp.allclose(out, ref, atol=2e-2, rtol=2e-2)

    print("KERNEL_OK")
</pallas_src>

<mosaic_0001>
module attributes {stable_mosaic.version = 11 : i64} {
  func.func @_fc_sigmoid_kernel(%arg0: i32, %arg1: i32, %arg2: i32, %arg3: memref<8x128xbf16, #tpu.memory_space<vmem>>, %arg4: memref<128x128xbf16, #tpu.memory_space<vmem>>, %arg5: memref<1x128xf32, #tpu.memory_space<vmem>>, %arg6: memref<8x128xf32, #tpu.memory_space<vmem>>, %arg7: memref<8x128xf32, #tpu.memory_space<vmem>>) attributes {dimension_semantics = [#tpu.dimension_semantics<parallel>, #tpu.dimension_semantics<parallel>, #tpu.dimension_semantics<arbitrary>], iteration_bounds = array<i64: 1, 1, 1>, scalar_prefetch = 0 : i64, scratch_operands = 1 : i64, tpu.core_type = #tpu.core_type<tc>, window_params = [{transform_indices = @transform_0, window_bounds = array<i64: 8, 128>}, {transform_indices = @transform_1, window_bounds = array<i64: 128, 128>}, {transform_indices = @transform_2, window_bounds = array<i64: 1, 128>}, {transform_indices = @transform_3, window_bounds = array<i64: 8, 128>}]} {
    %c0_i32 = arith.constant 0 : i32
    %0 = arith.cmpi eq, %arg2, %c0_i32 : i32
    %1 = arith.extui %0 : i1 to i32
    %c0_i32_0 = arith.constant 0 : i32
    %2 = arith.cmpi ne, %1, %c0_i32_0 : i32
    scf.if %2 {
      %cst_10 = arith.constant 0.000000e+00 : f32
      %12 = vector.broadcast %cst_10 : f32 to vector<8x128xf32>
      %c0_11 = arith.constant 0 : index
      %c0_12 = arith.constant 0 : index
      %13 = vector.load %arg7[%c0_11, %c0_12] : memref<8x128xf32, #tpu.memory_space<vmem>>, vector<8x128xf32>
      tpu.vector_store %arg7[%c0_11, %c0_12], %12 {strides = array<i32>} : memref<8x128xf32, #tpu.memory_space<vmem>>, vector<8x128xf32>,
    } else {
    }
    %c0 = arith.constant 0 : index
    %c0_1 = arith.constant 0 : index
    %3 = vector.load %arg7[%c0, %c0_1] : memref<8x128xf32, #tpu.memory_space<vmem>>, vector<8x128xf32>
    %c0_2 = arith.constant 0 : index
    %c0_3 = arith.constant 0 : index
    %4 = vector.load %arg3[%c0_2, %c0_3] : memref<8x128xbf16, #tpu.memory_space<vmem>>, vector<8x128xbf16>
    %c0_4 = arith.constant 0 : index
    %c0_5 = arith.constant 0 : index
    %5 = vector.load %arg4[%c0_4, %c0_5] : memref<128x128xbf16, #tpu.memory_space<vmem>>, vector<128x128xbf16>
    %cst = arith.constant dense<0.000000e+00> : vector<8x128xf32>
    %6 = tpu.matmul %4, %5, %cst {dimension_numbers = #tpu.dot_dimension_numbers<[1], [0], [0], [1], [0, 0, 1, 1], [], []>} : vector<8x128xbf16>, vector<128x128xbf16>, vector<8x128xf32> -> vector<8x128xf32>
    %7 = arith.addf %3, %6 : vector<8x128xf32>
    %c0_6 = arith.constant 0 : index
    %c0_7 = arith.constant 0 : index
    %8 = vector.load %arg7[%c0_6, %c0_7] : memref<8x128xf32, #tpu.memory_space<vmem>>, vector<8x128xf32>
    tpu.vector_store %arg7[%c0_6, %c0_7], %7 {strides = array<i32>} : memref<8x128xf32, #tpu.memory_space<vmem>>, vector<8x128xf32>,
    %c0_i32_8 = arith.constant 0 : i32
    %9 = arith.cmpi eq, %arg2, %c0_i32_8 : i32
    %10 = arith.extui %9 : i1 to i32
    %c0_i32_9 = arith.constant 0 : i32
    %11 = arith.cmpi ne, %10, %c0_i32_9 : i32
    scf.if %11 {
      %c0_10 = arith.constant 0 : index
      %c0_11 = arith.constant 0 : index
      %12 = vector.load %arg7[%c0_10, %c0_11] : memref<8x128xf32, #tpu.memory_space<vmem>>, vector<8x128xf32>
      %c0_12 = arith.constant 0 : index
      %c0_13 = arith.constant 0 : index
      %13 = vector.load %arg5[%c0_12, %c0_13] : memref<1x128xf32, #tpu.memory_space<vmem>>, vector<1x128xf32>
      %14 = vector.broadcast %13 : vector<1x128xf32> to vector<8x128xf32>
      %15 = arith.addf %12, %14 : vector<8x128xf32>
      %cst_14 = arith.constant 0.000000e+00 : f32
      %16 = vector.broadcast %cst_14 : f32 to vector<8x128xf32>
      %17 = arith.subf %16, %15 : vector<8x128xf32>
      %18 = math.exp %17 : vector<8x128xf32>
      %cst_15 = arith.constant 1.000000e+00 : f32
      %19 = vector.broadcast %cst_15 : f32 to vector<8x128xf32>
      %20 = arith.addf %19, %18 : vector<8x128xf32>
      %21 = tpu.reciprocal %20 {approx = true} : vector<8x128xf32> -> vector<8x128xf32>
      %c0_16 = arith.constant 0 : index
      %c0_17 = arith.constant 0 : index
      %22 = vector.load %arg6[%c0_16, %c0_17] : memref<8x128xf32, #tpu.memory_space<vmem>>, vector<8x128xf32>
      tpu.vector_store %arg6[%c0_16, %c0_17], %21 {strides = array<i32>} : memref<8x128xf32, #tpu.memory_space<vmem>>, vector<8x128xf32>,
    } else {
    }
    return
  }
  func.func @transform_0(%arg0: i32, %arg1: i32, %arg2: i32) -> (i32, i32) {
    %c0_i32 = arith.constant 0 : i32
    return %arg0, %arg2 : i32, i32
  }
  func.func @transform_1(%arg0: i32, %arg1: i32, %arg2: i32) -> (i32, i32) {
    %c0_i32 = arith.constant 0 : i32
    return %arg2, %arg1 : i32, i32
  }
  func.func @transform_2(%arg0: i32, %arg1: i32, %arg2: i32) -> (i32, i32) {
    %c0_i32 = arith.constant 0 : i32
    %c0_i32_0 = arith.constant 0 : i32
    return %c0_i32, %arg1 : i32, i32
  }
  func.func @transform_3(%arg0: i32, %arg1: i32, %arg2: i32) -> (i32, i32) {
    %c0_i32 = arith.constant 0 : i32
    return %arg0, %arg1 : i32, i32
  }
}

</mosaic_0001>

<llo_original>
// kernel: fully_connected_block.1
$region0: #{fully_connected_block.1}
  #allocation0 [shape = 'u32[]', space=smem, size = 0x4, offset = 0x4, fixed_abs, tag = 'smem constant byte address 0x4 - core index']
  #allocation1 [shape = 'u32[72,128]{1,0:T(1,128)}', space=vmem, size = 0x9000, scoped, tag = 'internal scratch']
  #allocation2 [shape = 'f32[8,128]{1,0:T(8,128)}', space=vmem, size = 0x1000, scoped, tag = 'scratch operand']
  %s0 = inlined_call_operand.vmem [shape: bf16[8,128], index: 0, kind: input, shape index: {}]
  %s1 = inlined_call_operand.vmem [shape: bf16[128,128], index: 1, kind: input, shape index: {}]
  %s2 = inlined_call_operand.vmem [shape: f32[1,128], index: 2, kind: input, shape index: {}]
  %s3 = inlined_call_operand.hbm [shape: f32[8,128], index: 3, kind: output, shape index: {}]
  %s4 = sld [smem:[#allocation0]]
  $region30: #{fully_connected_block.1} parent=0
    _
  %s6 = ssub.s32 1, %s4
  %s7 = scalar_select 0, %s6, %s4
  $region1: #{fully_connected_block.1} parent=0
    #allocation3 [shape = 'u8[4096]{0}', space=vmem, size = 0x1000, scoped, tag = 'output window, operand 0, single buffered']
    #allocation4 [shape = 's32[1]{0}', space=sflag, size = 0x4, scoped, tag = 'scoped memory for fully_connected_block.1']
    %8 = vsyncpa [#allocation4], 0
    // Predicated region
    $region2: #{fully_connected_block.1} parent=1 // pred_check
      _
    $region3: #{fully_connected_block.1} parent=1 // pred_check_branch
      %10 = sbr.rel (0) target = $region5
    $region4: #{fully_connected_block.1} parent=1 // pred_region
      _
    $region5: #{fully_connected_block.1} parent=1 // pred_fallthru
      _
    // Predicated region
    $region6: #{fully_connected_block.1} parent=1 // pred_check
      _
    $region7: #{fully_connected_block.1} parent=1 // pred_check_branch
      %12 = sbr.rel (0) target = $region9
    $region8: #{fully_connected_block.1} parent=1 // pred_region
      _
    $region9: #{fully_connected_block.1} parent=1 // pred_fallthru
      _
    // Predicated region
    $region10: #{fully_connected_block.1} parent=1 // pred_check
      _
    $region11: #{fully_connected_block.1} parent=1 // pred_check_branch
      %14 = sbr.rel (0) target = $region13
    $region12: #{fully_connected_block.1} parent=1 // pred_region
      _
    $region13: #{fully_connected_block.1} parent=1 // pred_fallthru
      _
    %p15 = scmp.eq.s32.totalorder 0, 0
    // Predicated region
    $region14: #{fully_connected_block.1} parent=1 // pred_check
      %p16 = pneg %p15
    $region15: #{fully_connected_block.1} parent=1 // pred_check_branch
      %18 = sbr.rel (%p16) target = $region17
    $region16: #{fully_connected_block.1} parent=1 // pred_region
      %19 = vst [vmem:[#allocation2] sm:$0xff] 0.0
    $region17: #{fully_connected_block.1} parent=1 // pred_fallthru
      _
    %v20 = vld [vmem:[#allocation2] sm:$0xff]
    %v21 = vld [vmem:[%s0] sm:$0xf]
    %v22 = vld [vmem:[%s1] sm:$0xf]
    %v23 = vld [vmem:[%s1 + $0x4] sm:$0xf]
    %v24 = vld [vmem:[%s1 + $0x8] sm:$0xf]
    %v25 = vld [vmem:[%s1 + $0xc] sm:$0xf]
    %v26 = vld [vmem:[%s1 + $0x10] sm:$0xf]
    %v27 = vld [vmem:[%s1 + $0x14] sm:$0xf]
    %v28 = vld [vmem:[%s1 + $0x18] sm:$0xf]
    %v29 = vld [vmem:[%s1 + $0x1c] sm:$0xf]
    %v30 = vld [vmem:[%s1 + $0x20] sm:$0xf]
    %v31 = vld [vmem:[%s1 + $0x24] sm:$0xf]
    %v32 = vld [vmem:[%s1 + $0x28] sm:$0xf]
    %v33 = vld [vmem:[%s1 + $0x2c] sm:$0xf]
    %v34 = vld [vmem:[%s1 + $0x30] sm:$0xf]
    %v35 = vld [vmem:[%s1 + $0x34] sm:$0xf]
    %v36 = vld [vmem:[%s1 + $0x38] sm:$0xf]
    %v37 = vld [vmem:[%s1 + $0x3c] sm:$0xf]
    %v54 = vunpack.c.l.b16 %v22
    %v55 = vunpack.c.l.b16 %v23
    %v56 = vunpack.c.l.b16 %v24
    %v57 = vunpack.c.l.b16 %v25
    %v58 = vunpack.c.l.b16 %v26
    %v59 = vunpack.c.l.b16 %v27
    %v60 = vunpack.c.l.b16 %v28
    %v61 = vunpack.c.l.b16 %v29
    %v62 = vunpack.c.l.b16 %v30
    %v63 = vunpack.c.l.b16 %v31
    %v64 = vunpack.c.l.b16 %v32
    %v65 = vunpack.c.l.b16 %v33
    %v66 = vunpack.c.l.b16 %v34
    %v67 = vunpack.c.l.b16 %v35
    %v68 = vunpack.c.l.b16 %v36
    %v69 = vunpack.c.l.b16 %v37
    %v70 = vpack.c.b16 %v55, %v54
    %v71 = vpack.c.b16 %v57, %v56
    %v72 = vpack.c.b16 %v59, %v58
    %v73 = vpack.c.b16 %v61, %v60
    %v74 = vpack.c.b16 %v63, %v62
    %v75 = vpack.c.b16 %v65, %v64
    %v76 = vpack.c.b16 %v67, %v66
    %v77 = vpack.c.b16 %v69, %v68
    %86 = vmatpush.bf16.msra.mxu0 %v77
    %87 = vmatpush.bf16.msra.mxu0 %v76
    %88 = vmatpush.bf16.msra.mxu0 %v75
    %89 = vmatpush.bf16.msra.mxu0 %v74
    %90 = vmatpush.bf16.msra.mxu0 %v73
    %91 = vmatpush.bf16.msra.mxu0 %v72
    %92 = vmatpush.bf16.msra.mxu0 %v71
    %93 = vmatpush.bf16.msra.mxu0 %v70
    %94 = vmatmul.bf16.gmra.mxu0 %v21
    %v95 = vpop.f32.mrf.mxu0
    %v96 = vadd.f32 0.0, %v95
    %v97 = vpop.f32.mrf.mxu0
    %98 = vdwg.mxu0
    %v99 = vadd.f32 %v20, %v96
    %100 = vst [vmem:[#allocation2] sm:$0xff] %v99
    // Predicated region
    $region18: #{fully_connected_block.1} parent=1 // pred_check
      %p101 = pneg %p15
    $region19: #{fully_connected_block.1} parent=1 // pred_check_branch
      %103 = sbr.rel (%p101) target = $region21
    $region20: #{fully_connected_block.1} parent=1 // pred_region
      %v104 = vld [vmem:[#allocation2] sm:$0xff]
      %v105 = vld [vmem:[%s2] sm:$0x1]
      %v107 = vperm.slane %v105, 0
      %v109 = vadd.f32 %v104, %v107
      %v110 = vsub.f32 0.0, %v109
      %v111 = vmul.f32 %v110, 1.442695
      %v112 = vpow.pop %v111
      %v113 = vadd.f32 %v112, 1.0
      %v114 = vrcp.pop %v113
      %115 = vst [vmem:[#allocation3] sm:$0xff] %v114
    $region21: #{fully_connected_block.1} parent=1 // pred_fallthru
      _
    // Predicated region
    $region22: #{fully_connected_block.1} parent=1 // pred_check
      _
    $region23: #{fully_connected_block.1} parent=1 // pred_check_branch
      %117 = sbr.rel (0) target = $region25
    $region24: #{fully_connected_block.1} parent=1 // pred_region
      %119 = vsyncadd [#allocation4], 0
      %s121 = sshll.u32 [#allocation3], 4
      %s122 = int_to_ptr.vmem [resolvable:$true] %s121
      %s123 = sshll.u32 %s3, 4
      %s124 = int_to_ptr.hbm [resolvable:$true] %s123
      %126 = dma.vmem_to_hbm [thread:$0]  %s122, 128, %s124, [#allocation4]
    $region25: #{fully_connected_block.1} parent=1 // pred_fallthru
      _
    // Predicated region
    $region26: #{fully_connected_block.1} parent=1 // pred_check
      _
    $region27: #{fully_connected_block.1} parent=1 // pred_check_branch
      %128 = sbr.rel (0) target = $region29
    $region28: #{fully_connected_block.1} parent=1 // pred_region
      %130 = dma.done [#allocation4], 128
    $region29: #{fully_connected_block.1} parent=1 // pred_fallthru
      _
    %131 = vsyncpa [#allocation4], 1

</llo_original>
